<compile_context>
chip_gen: v6e
topology: v6e:2x2x1
jax: 0.10.0
libtpu: 0.0.40
codegen_flags: <defaults>
</compile_context>

<pallas_src>
import jax
import jax.numpy as jnp
from jax.experimental import pallas as pl
from jax.experimental.pallas import tpu as pltpu


def social_encoder_forward(nodes, adj, feat_table, w, b, *, tb_max=256, tk_max=512):
    """GraphRec Social_Encoder forward.

    nodes      : [B]      int32 query node ids
    adj        : [B, N]   0/1 float adjacency mask (node -> neighbor)
    feat_table : [N, D]   embedding table
    w          : [D, 2D]  PyTorch-style nn.Linear(2D, D) weight
    b          : [D]      bias
    returns    : [B, D]   relu(Linear(cat([self, neigh_mean], 1)))
    """
    B = nodes.shape[0]
    N, D = feat_table.shape

    # ---- tile / padding derivation -------------------------------------------
    Dp = pl.cdiv(D, 128) * 128                 # lane-dense embed dim (no +1 column)
    Bp0 = pl.cdiv(B, 8) * 8
    tb = min(tb_max, Bp0)                      # multiple of 8 (Bp0 is)
    Bp = pl.cdiv(B, tb) * tb
    Np0 = pl.cdiv(N, 128) * 128
    tk = min(tk_max, Np0)                      # multiple of 128 (and 256 when >=512)
    Np = pl.cdiv(N, tk) * tk

    # ---- wrapper-side packing (layout / gather plumbing only) ----------------
    feat_p = jnp.zeros((Np, Dp), jnp.float32).at[:N, :D].set(feat_table)
    feat_b = feat_p.astype(jnp.bfloat16)

    adj_p = jnp.zeros((Bp, Np), jnp.float32).at[:B, :N].set(adj)
    adj_b = adj_p.astype(jnp.bfloat16)                           # 0/1 -> exact in bf16

    # self_feats = features(nodes): embedding lookup, fed as a normal tiled input.
    self_feats = feat_table[nodes.astype(jnp.int32)]             # [B, D]
    self_b = (jnp.zeros((Bp, Dp), jnp.float32)
              .at[:B, :D].set(self_feats)).astype(jnp.bfloat16)

    w_t = w.T                                                    # [2D, D]
    w_self_b = (jnp.zeros((Dp, Dp), jnp.float32)
                .at[:D, :D].set(w_t[:D])).astype(jnp.bfloat16)
    w_neigh_b = (jnp.zeros((Dp, Dp), jnp.float32)
                 .at[:D, :D].set(w_t[D:])).astype(jnp.bfloat16)
    b_p = jnp.zeros((1, Dp), jnp.float32).at[0, :D].set(b)

    # ---- kernel ---------------------------------------------------------------
    def kernel(adj_ref, feat_ref, self_ref, w_self_ref, w_neigh_ref, b_ref,
               out_ref, acc_ref, cnt_ref):
        k = pl.program_id(1)                   # neighbor (reduction) tile

        @pl.when(k == 0)
        def _():
            acc_ref[...] = jnp.zeros_like(acc_ref)
            cnt_ref[...] = jnp.zeros_like(cnt_ref)

        adj_tile = adj_ref[...]                                       # [tb, tk] bf16
        # Streamed neighbor aggregation (MXU, f32 accumulate).
        acc_ref[...] += jnp.dot(adj_tile, feat_ref[...],
                                preferred_element_type=jnp.float32)
        # Neighbor count: XLU row-sum of the adj tile already in VMEM (free slot).
        cnt_ref[...] += jnp.sum(adj_tile.astype(jnp.float32),
                                axis=-1, keepdims=True)

        @pl.when(k == pl.num_programs(1) - 1)
        def _():
            inv = pl.reciprocal(jnp.maximum(cnt_ref[...], 1.0), approx=True)  # [tb,1]
            # Scale the f32 sum to a mean BEFORE the bf16 cast (accuracy win).
            neigh_mean = (acc_ref[...] * inv).astype(jnp.bfloat16)            # [tb,Dp]
            neigh_term = jnp.dot(neigh_mean, w_neigh_ref[...],
                                 preferred_element_type=jnp.float32)
            self_term = jnp.dot(self_ref[...], w_self_ref[...],
                                preferred_element_type=jnp.float32)
            out_ref[...] = jnp.maximum(self_term + neigh_term + b_ref[...],
                                       0.0).astype(out_ref.dtype)

    out_p = pl.pallas_call(
        kernel,
        out_shape=jax.ShapeDtypeStruct((Bp, Dp), jnp.float32),
        grid_spec=pltpu.PrefetchScalarGridSpec(
            num_scalar_prefetch=0,
            grid=(Bp // tb, Np // tk),                 # reduction axis last
            in_specs=[
                pl.BlockSpec((tb, tk), lambda i, k: (i, k)),    # adj (streamed)
                pl.BlockSpec((tk, Dp), lambda i, k: (k, 0)),    # feat_table (streamed)
                pl.BlockSpec((tb, Dp), lambda i, k: (i, 0)),    # gathered self rows
                pl.BlockSpec((Dp, Dp), lambda i, k: (0, 0)),    # w_self (resident)
                pl.BlockSpec((Dp, Dp), lambda i, k: (0, 0)),    # w_neigh (resident)
                pl.BlockSpec((1, Dp), lambda i, k: (0, 0)),     # bias (resident)
            ],
            out_specs=pl.BlockSpec((tb, Dp), lambda i, k: (i, 0)),
            scratch_shapes=[
                pltpu.VMEM((tb, Dp), jnp.float32),     # f32 neighbor-sum accumulator
                pltpu.VMEM((tb, 1), jnp.float32),      # f32 neighbor count
            ]),
        compiler_params=pltpu.CompilerParams(
            dimension_semantics=("parallel", "arbitrary")),
    )(adj_b, feat_b, self_b, w_self_b, w_neigh_b, b_p)

    return out_p[:B, :D]


if __name__ == "__main__":
    key = jax.random.PRNGKey(0)
    k_feat, k_w, k_b, k_nodes, k_adj = jax.random.split(key, 5)

    num_nodes = 256     # total users in the graph
    embed_dim = 32      # D
    batch = 8           # query nodes

    # Deterministic synthetic "parameters" (no checkpoint load).
    feat_table = jax.random.normal(k_feat, (num_nodes, embed_dim), jnp.float32) * 0.1
    w = jax.random.normal(k_w, (embed_dim, 2 * embed_dim), jnp.float32) * 0.1  # Linear(2D, D)
    b = jax.random.normal(k_b, (embed_dim,), jnp.float32) * 0.1

    # Query nodes + synthetic social adjacency (stands in for the Neo4j query).
    nodes = jax.random.randint(k_nodes, (batch,), 0, num_nodes, dtype=jnp.int32)
    adj = (jax.random.uniform(k_adj, (batch, num_nodes)) < 0.1).astype(jnp.float32)

    out = social_encoder_forward(nodes, adj, feat_table, w, b)
    out = jax.block_until_ready(out)

    # Pure-JAX f32 reference of the same semantics.
    self_feats = feat_table[nodes]
    neigh = (adj @ feat_table) / jnp.maximum(adj.sum(-1, keepdims=True), 1.0)
    ref = jnp.maximum(jnp.concatenate([self_feats, neigh], axis=1) @ w.T + b, 0.0)

    assert out.shape == (batch, embed_dim)
    # bf16 MXU operands + approx reciprocal -> loosened tolerance.
    assert jnp.allclose(out, ref, atol=2e-2, rtol=2e-2), float(jnp.max(jnp.abs(out - ref)))

    print("KERNEL_OK")
</pallas_src>

<mosaic_0001>
module attributes {stable_mosaic.version = 11 : i64} {
  func.func @kernel(%arg0: i32, %arg1: i32, %arg2: memref<8x256xbf16, #tpu.memory_space<vmem>>, %arg3: memref<256x128xbf16, #tpu.memory_space<vmem>>, %arg4: memref<8x128xbf16, #tpu.memory_space<vmem>>, %arg5: memref<128x128xbf16, #tpu.memory_space<vmem>>, %arg6: memref<128x128xbf16, #tpu.memory_space<vmem>>, %arg7: memref<1x128xf32, #tpu.memory_space<vmem>>, %arg8: memref<8x128xf32, #tpu.memory_space<vmem>>, %arg9: memref<8x128xf32, #tpu.memory_space<vmem>>, %arg10: memref<8x1xf32, #tpu.memory_space<vmem>>) attributes {dimension_semantics = [#tpu.dimension_semantics<parallel>, #tpu.dimension_semantics<arbitrary>], iteration_bounds = array<i64: 1, 1>, scalar_prefetch = 0 : i64, scratch_operands = 2 : i64, tpu.core_type = #tpu.core_type<tc>, window_params = [{transform_indices = @transform_0, window_bounds = array<i64: 8, 256>}, {transform_indices = @transform_1, window_bounds = array<i64: 256, 128>}, {transform_indices = @transform_2, window_bounds = array<i64: 8, 128>}, {pipeline_mode = #tpu.pipeline_mode<synchronous>, transform_indices = @transform_3, window_bounds = array<i64: 128, 128>}, {pipeline_mode = #tpu.pipeline_mode<synchronous>, transform_indices = @transform_4, window_bounds = array<i64: 128, 128>}, {pipeline_mode = #tpu.pipeline_mode<synchronous>, transform_indices = @transform_5, window_bounds = array<i64: 1, 128>}, {transform_indices = @transform_6, window_bounds = array<i64: 8, 128>}]} {
    %c0_i32 = arith.constant 0 : i32
    %0 = arith.cmpi eq, %arg1, %c0_i32 : i32
    %1 = arith.extui %0 : i1 to i32
    %c0_i32_0 = arith.constant 0 : i32
    %2 = arith.cmpi ne, %1, %c0_i32_0 : i32
    scf.if %2 {
      %cst_15 = arith.constant 0.000000e+00 : f32
      %18 = vector.broadcast %cst_15 : f32 to vector<8x128xf32>
      %c0_16 = arith.constant 0 : index
      %c0_17 = arith.constant 0 : index
      %19 = vector.load %arg9[%c0_16, %c0_17] : memref<8x128xf32, #tpu.memory_space<vmem>>, vector<8x128xf32>
      tpu.vector_store %arg9[%c0_16, %c0_17], %18 {strides = array<i32>} : memref<8x128xf32, #tpu.memory_space<vmem>>, vector<8x128xf32>,
      %cst_18 = arith.constant 0.000000e+00 : f32
      %20 = vector.broadcast %cst_18 : f32 to vector<8x1xf32>
      %c0_19 = arith.constant 0 : index
      %c0_20 = arith.constant 0 : index
      %21 = vector.load %arg10[%c0_19, %c0_20] : memref<8x1xf32, #tpu.memory_space<vmem>>, vector<8x1xf32>
      tpu.vector_store %arg10[%c0_19, %c0_20], %20 {strides = array<i32>} : memref<8x1xf32, #tpu.memory_space<vmem>>, vector<8x1xf32>,
    } else {
    }
    %c0 = arith.constant 0 : index
    %c0_1 = arith.constant 0 : index
    %3 = vector.load %arg2[%c0, %c0_1] : memref<8x256xbf16, #tpu.memory_space<vmem>>, vector<8x256xbf16>
    %c0_2 = arith.constant 0 : index
    %c0_3 = arith.constant 0 : index
    %4 = vector.load %arg9[%c0_2, %c0_3] : memref<8x128xf32, #tpu.memory_space<vmem>>, vector<8x128xf32>
    %c0_4 = arith.constant 0 : index
    %c0_5 = arith.constant 0 : index
    %5 = vector.load %arg3[%c0_4, %c0_5] : memref<256x128xbf16, #tpu.memory_space<vmem>>, vector<256x128xbf16>
    %cst = arith.constant dense<0.000000e+00> : vector<8x128xf32>
    %6 = tpu.matmul %3, %5, %cst {dimension_numbers = #tpu.dot_dimension_numbers<[1], [0], [0], [1], [0, 0, 1, 1], [], []>} : vector<8x256xbf16>, vector<256x128xbf16>, vector<8x128xf32> -> vector<8x128xf32>
    %7 = arith.addf %4, %6 : vector<8x128xf32>
    %c0_6 = arith.constant 0 : index
    %c0_7 = arith.constant 0 : index
    %8 = vector.load %arg9[%c0_6, %c0_7] : memref<8x128xf32, #tpu.memory_space<vmem>>, vector<8x128xf32>
    tpu.vector_store %arg9[%c0_6, %c0_7], %7 {strides = array<i32>} : memref<8x128xf32, #tpu.memory_space<vmem>>, vector<8x128xf32>,
    %c0_8 = arith.constant 0 : index
    %c0_9 = arith.constant 0 : index
    %9 = vector.load %arg10[%c0_8, %c0_9] : memref<8x1xf32, #tpu.memory_space<vmem>>, vector<8x1xf32>
    %10 = arith.extf %3 : vector<8x256xbf16> to vector<8x256xf32>
    %cst_10 = arith.constant dense<0.000000e+00> : vector<8xf32>
    %11 = vector.multi_reduction <add>, %10, %cst_10 [1] : vector<8x256xf32> to vector<8xf32>
    %12 = vector.shape_cast %11 : vector<8xf32> to vector<8x1xf32>
    %13 = arith.addf %9, %12 : vector<8x1xf32>
    %c0_11 = arith.constant 0 : index
    %c0_12 = arith.constant 0 : index
    %14 = vector.load %arg10[%c0_11, %c0_12] : memref<8x1xf32, #tpu.memory_space<vmem>>, vector<8x1xf32>
    tpu.vector_store %arg10[%c0_11, %c0_12], %13 {strides = array<i32>} : memref<8x1xf32, #tpu.memory_space<vmem>>, vector<8x1xf32>,
    %c0_i32_13 = arith.constant 0 : i32
    %15 = arith.cmpi eq, %arg1, %c0_i32_13 : i32
    %16 = arith.extui %15 : i1 to i32
    %c0_i32_14 = arith.constant 0 : i32
    %17 = arith.cmpi ne, %16, %c0_i32_14 : i32
    scf.if %17 {
      %c0_15 = arith.constant 0 : index
      %c0_16 = arith.constant 0 : index
      %18 = vector.load %arg10[%c0_15, %c0_16] : memref<8x1xf32, #tpu.memory_space<vmem>>, vector<8x1xf32>
      %cst_17 = arith.constant 1.000000e+00 : f32
      %19 = vector.broadcast %cst_17 : f32 to vector<8x1xf32>
      %20 = arith.maximumf %18, %19 : vector<8x1xf32>
      %21 = tpu.reciprocal %20 {approx = true} : vector<8x1xf32> -> vector<8x1xf32>
      %c0_18 = arith.constant 0 : index
      %c0_19 = arith.constant 0 : index
      %22 = vector.load %arg9[%c0_18, %c0_19] : memref<8x128xf32, #tpu.memory_space<vmem>>, vector<8x128xf32>
      %23 = vector.broadcast %21 : vector<8x1xf32> to vector<8x128xf32>
      %24 = arith.mulf %22, %23 : vector<8x128xf32>
      %25 = arith.truncf %24 : vector<8x128xf32> to vector<8x128xbf16>
      %c0_20 = arith.constant 0 : index
      %c0_21 = arith.constant 0 : index
      %26 = vector.load %arg6[%c0_20, %c0_21] : memref<128x128xbf16, #tpu.memory_space<vmem>>, vector<128x128xbf16>
      %cst_22 = arith.constant dense<0.000000e+00> : vector<8x128xf32>
      %27 = tpu.matmul %25, %26, %cst_22 {dimension_numbers = #tpu.dot_dimension_numbers<[1], [0], [0], [1], [0, 0, 1, 1], [], []>} : vector<8x128xbf16>, vector<128x128xbf16>, vector<8x128xf32> -> vector<8x128xf32>
      %c0_23 = arith.constant 0 : index
      %c0_24 = arith.constant 0 : index
      %28 = vector.load %arg4[%c0_23, %c0_24] : memref<8x128xbf16, #tpu.memory_space<vmem>>, vector<8x128xbf16>
      %c0_25 = arith.constant 0 : index
      %c0_26 = arith.constant 0 : index
      %29 = vector.load %arg5[%c0_25, %c0_26] : memref<128x128xbf16, #tpu.memory_space<vmem>>, vector<128x128xbf16>
      %cst_27 = arith.constant dense<0.000000e+00> : vector<8x128xf32>
      %30 = tpu.matmul %28, %29, %cst_27 {dimension_numbers = #tpu.dot_dimension_numbers<[1], [0], [0], [1], [0, 0, 1, 1], [], []>} : vector<8x128xbf16>, vector<128x128xbf16>, vector<8x128xf32> -> vector<8x128xf32>
      %31 = arith.addf %30, %27 : vector<8x128xf32>
      %c0_28 = arith.constant 0 : index
      %c0_29 = arith.constant 0 : index
      %32 = vector.load %arg7[%c0_28, %c0_29] : memref<1x128xf32, #tpu.memory_space<vmem>>, vector<1x128xf32>
      %33 = vector.broadcast %32 : vector<1x128xf32> to vector<8x128xf32>
      %34 = arith.addf %31, %33 : vector<8x128xf32>
      %cst_30 = arith.constant 0.000000e+00 : f32
      %35 = vector.broadcast %cst_30 : f32 to vector<8x128xf32>
      %36 = arith.maximumf %34, %35 : vector<8x128xf32>
      %c0_31 = arith.constant 0 : index
      %c0_32 = arith.constant 0 : index
      %37 = vector.load %arg8[%c0_31, %c0_32] : memref<8x128xf32, #tpu.memory_space<vmem>>, vector<8x128xf32>
      tpu.vector_store %arg8[%c0_31, %c0_32], %36 {strides = array<i32>} : memref<8x128xf32, #tpu.memory_space<vmem>>, vector<8x128xf32>,
    } else {
    }
    return
  }
  func.func @transform_0(%arg0: i32, %arg1: i32) -> (i32, i32) {
    %c0_i32 = arith.constant 0 : i32
    return %arg0, %arg1 : i32, i32
  }
  func.func @transform_1(%arg0: i32, %arg1: i32) -> (i32, i32) {
    %c0_i32 = arith.constant 0 : i32
    %c0_i32_0 = arith.constant 0 : i32
    return %arg1, %c0_i32 : i32, i32
  }
  func.func @transform_2(%arg0: i32, %arg1: i32) -> (i32, i32) {
    %c0_i32 = arith.constant 0 : i32
    %c0_i32_0 = arith.constant 0 : i32
    return %arg0, %c0_i32 : i32, i32
  }
  func.func @transform_3(%arg0: i32, %arg1: i32) -> (i32, i32) {
    %c0_i32 = arith.constant 0 : i32
    %c0_i32_0 = arith.constant 0 : i32
    %c0_i32_1 = arith.constant 0 : i32
    return %c0_i32, %c0_i32_0 : i32, i32
  }
  func.func @transform_4(%arg0: i32, %arg1: i32) -> (i32, i32) {
    %c0_i32 = arith.constant 0 : i32
    %c0_i32_0 = arith.constant 0 : i32
    %c0_i32_1 = arith.constant 0 : i32
    return %c0_i32, %c0_i32_0 : i32, i32
  }
  func.func @transform_5(%arg0: i32, %arg1: i32) -> (i32, i32) {
    %c0_i32 = arith.constant 0 : i32
    %c0_i32_0 = arith.constant 0 : i32
    %c0_i32_1 = arith.constant 0 : i32
    return %c0_i32, %c0_i32_0 : i32, i32
  }
  func.func @transform_6(%arg0: i32, %arg1: i32) -> (i32, i32) {
    %c0_i32 = arith.constant 0 : i32
    %c0_i32_0 = arith.constant 0 : i32
    return %arg0, %c0_i32 : i32, i32
  }
}

</mosaic_0001>

<llo_original>
// kernel: tpu_custom_call.1
$region0: #{tpu_custom_call.1}
  #allocation0 [shape = 'u32[]', space=smem, size = 0x4, offset = 0x4, fixed_abs, tag = 'smem constant byte address 0x4 - core index']
  #allocation1 [shape = 'u32[144,128]{1,0:T(1,128)}', space=vmem, size = 0x12000, scoped, tag = 'internal scratch']
  #allocation2 [shape = 'f32[8,128]{1,0:T(8,128)}', space=vmem, size = 0x1000, scoped, tag = 'scratch operand']
  #allocation3 [shape = 'f32[8,1]{1,0:T(8,128)}', space=vmem, size = 0x1000, scoped, tag = 'scratch operand']
  %s0 = inlined_call_operand.hbm [shape: bf16[8,256], index: 0, kind: input, shape index: {}]
  %s1 = inlined_call_operand.hbm [shape: bf16[256,128], index: 1, kind: input, shape index: {}]
  %s2 = inlined_call_operand.hbm [shape: bf16[8,128], index: 2, kind: input, shape index: {}]
  %s3 = inlined_call_operand.hbm [shape: bf16[128,128], index: 3, kind: input, shape index: {}]
  %s4 = inlined_call_operand.hbm [shape: bf16[128,128], index: 4, kind: input, shape index: {}]
  %s5 = inlined_call_operand.vmem [shape: f32[1,128], index: 5, kind: input, shape index: {}]
  %s6 = inlined_call_operand.hbm [shape: f32[8,128], index: 6, kind: output, shape index: {}]
  %s7 = sld [smem:[#allocation0]]
  $region62: #{tpu_custom_call.1} parent=0
    _
  %s9 = ssub.s32 1, %s7
  %s10 = scalar_select 0, %s9, %s7
  $region1: #{tpu_custom_call.1} parent=0
    #allocation4 [shape = 'u8[4096]{0}', space=vmem, size = 0x1000, scoped, tag = 'input window, operand 0, single buffered']
    #allocation5 [shape = 's32[1]{0}', space=sflag, size = 0x4, scoped, tag = 'scoped memory for tpu_custom_call.1']
    #allocation6 [shape = 's32[1]{0}', space=sflag, size = 0x4, scoped, tag = 'scoped memory for tpu_custom_call.1']
    #allocation7 [shape = 'u8[65536]{0}', space=vmem, size = 0x10000, scoped, tag = 'input window, operand 1, single buffered']
    #allocation8 [shape = 's32[1]{0}', space=sflag, size = 0x4, scoped, tag = 'scoped memory for tpu_custom_call.1']
    #allocation9 [shape = 'u8[2048]{0}', space=vmem, size = 0x800, scoped, tag = 'input window, operand 2, single buffered']
    #allocation10 [shape = 'u8[32768]{0}', space=vmem, size = 0x8000, scoped, tag = 'input window, operand 3, single buffered']
    #allocation11 [shape = 's32[1]{0}', space=sflag, size = 0x4, scoped, tag = 'scoped memory for tpu_custom_call.1']
    #allocation12 [shape = 'u8[32768]{0}', space=vmem, size = 0x8000, scoped, tag = 'input window, operand 4, single buffered']
    #allocation13 [shape = 'u8[4096]{0}', space=vmem, size = 0x1000, scoped, tag = 'output window, operand 0, single buffered']
    %11 = vsyncpa [#allocation5], 0
    %12 = vsyncpa [#allocation8], 0
    %13 = vsyncpa [#allocation11], 0
    %14 = vsyncpa [#allocation6], 0
    // Predicated region
    $region2: #{tpu_custom_call.1} parent=1 // pred_check
      _
    $region3: #{tpu_custom_call.1} parent=1 // pred_check_branch
      %16 = sbr.rel (0) target = $region5
    $region4: #{tpu_custom_call.1} parent=1 // pred_region
      %s18 = ssub.s32 128, 128
      %19 = vsyncadd [#allocation5], %s18
      %s21 = sshll.u32 [#allocation4], 4
      %s22 = int_to_ptr.vmem [resolvable:$true] %s21
      %24 = dma.hbm_to_vmem [thread:$0]  %s0, 128, %s22, [#allocation5]
    $region5: #{tpu_custom_call.1} parent=1 // pred_fallthru
      _
    // Predicated region
    $region6: #{tpu_custom_call.1} parent=1 // pred_check
      _
    $region7: #{tpu_custom_call.1} parent=1 // pred_check_branch
      %26 = sbr.rel (0) target = $region9
    $region8: #{tpu_custom_call.1} parent=1 // pred_region
      %s28 = ssub.s32 2048, 2048
      %29 = vsyncadd [#allocation8], %s28
      %s30 = sshll.u32 [#allocation7], 4
      %s31 = int_to_ptr.vmem [resolvable:$true] %s30
      %36 = dma.hbm_to_vmem [thread:$0]  %s1, 2048, %s31, [#allocation8], 64, 64, 4
    $region9: #{tpu_custom_call.1} parent=1 // pred_fallthru
      _
    // Predicated region
    $region10: #{tpu_custom_call.1} parent=1 // pred_check
      _
    $region11: #{tpu_custom_call.1} parent=1 // pred_check_branch
      %38 = sbr.rel (0) target = $region13
    $region12: #{tpu_custom_call.1} parent=1 // pred_region
      %s40 = ssub.s32 64, 64
      %41 = vsyncadd [#allocation8], %s40
      %s43 = sshll.u32 [#allocation9], 4
      %s44 = int_to_ptr.vmem [resolvable:$true] %s43
      %46 = dma.hbm_to_vmem [thread:$0]  %s2, 64, %s44, [#allocation8]
    $region13: #{tpu_custom_call.1} parent=1 // pred_fallthru
      _
    // Predicated region
    $region14: #{tpu_custom_call.1} parent=1 // pred_check
      _
    $region15: #{tpu_custom_call.1} parent=1 // pred_check_branch
      %48 = sbr.rel (0) target = $region17
    $region16: #{tpu_custom_call.1} parent=1 // pred_region
      %s50 = ssub.s32 1024, 1024
      %51 = vsyncadd [#allocation11], %s50
      %s52 = sshll.u32 [#allocation10], 4
      %s53 = int_to_ptr.vmem [resolvable:$true] %s52
      %58 = dma.hbm_to_vmem [thread:$0]  %s3, 1024, %s53, [#allocation11], 64, 64, 4
    $region17: #{tpu_custom_call.1} parent=1 // pred_fallthru
      _
    // Predicated region
    $region18: #{tpu_custom_call.1} parent=1 // pred_check
      _
    $region19: #{tpu_custom_call.1} parent=1 // pred_check_branch
      %60 = sbr.rel (0) target = $region21
    $region20: #{tpu_custom_call.1} parent=1 // pred_region
      %s62 = ssub.s32 1024, 1024
      %63 = vsyncadd [#allocation11], %s62
      %s64 = sshll.u32 [#allocation12], 4
      %s65 = int_to_ptr.vmem [resolvable:$true] %s64
      %70 = dma.hbm_to_vmem [thread:$0]  %s4, 1024, %s65, [#allocation11], 64, 64, 4
    $region21: #{tpu_custom_call.1} parent=1 // pred_fallthru
      _
    // Predicated region
    $region22: #{tpu_custom_call.1} parent=1 // pred_check
      _
    $region23: #{tpu_custom_call.1} parent=1 // pred_check_branch
      %72 = sbr.rel (0) target = $region25
    $region24: #{tpu_custom_call.1} parent=1 // pred_region
      _
    $region25: #{tpu_custom_call.1} parent=1 // pred_fallthru
      _
    // Predicated region
    $region26: #{tpu_custom_call.1} parent=1 // pred_check
      _
    $region27: #{tpu_custom_call.1} parent=1 // pred_check_branch
      %74 = sbr.rel (0) target = $region29
    $region28: #{tpu_custom_call.1} parent=1 // pred_region
      %75 = dma.done [#allocation5], 128
    $region29: #{tpu_custom_call.1} parent=1 // pred_fallthru
      _
    // Predicated region
    $region30: #{tpu_custom_call.1} parent=1 // pred_check
      _
    $region31: #{tpu_custom_call.1} parent=1 // pred_check_branch
      %77 = sbr.rel (0) target = $region33
    $region32: #{tpu_custom_call.1} parent=1 // pred_region
      %78 = dma.done [#allocation8], 2048
    $region33: #{tpu_custom_call.1} parent=1 // pred_fallthru
      _
    // Predicated region
    $region34: #{tpu_custom_call.1} parent=1 // pred_check
      _
    $region35: #{tpu_custom_call.1} parent=1 // pred_check_branch
      %80 = sbr.rel (0) target = $region37
    $region36: #{tpu_custom_call.1} parent=1 // pred_region
      %81 = dma.done [#allocation8], 64
    $region37: #{tpu_custom_call.1} parent=1 // pred_fallthru
      _
    // Predicated region
    $region38: #{tpu_custom_call.1} parent=1 // pred_check
      _
    $region39: #{tpu_custom_call.1} parent=1 // pred_check_branch
      %83 = sbr.rel (0) target = $region41
    $region40: #{tpu_custom_call.1} parent=1 // pred_region
      %84 = dma.done [#allocation11], 1024
    $region41: #{tpu_custom_call.1} parent=1 // pred_fallthru
      _
    // Predicated region
    $region42: #{tpu_custom_call.1} parent=1 // pred_check
      _
    $region43: #{tpu_custom_call.1} parent=1 // pred_check_branch
      %86 = sbr.rel (0) target = $region45
    $region44: #{tpu_custom_call.1} parent=1 // pred_region
      %87 = dma.done [#allocation11], 1024
    $region45: #{tpu_custom_call.1} parent=1 // pred_fallthru
      _
    %p89 = scmp.eq.s32.totalorder 0, 0
    // Predicated region
    $region46: #{tpu_custom_call.1} parent=1 // pred_check
      %p90 = pneg %p89
    $region47: #{tpu_custom_call.1} parent=1 // pred_check_branch
      %92 = sbr.rel (%p90) target = $region49
    $region48: #{tpu_custom_call.1} parent=1 // pred_region
      %93 = vst [vmem:[#allocation2] sm:$0xff] 0.0
      %vm94 = vcmask 7168
      %95 = vst.msk [vmem:[#allocation3] sm:$0xff] %vm94, 0.0
    $region49: #{tpu_custom_call.1} parent=1 // pred_fallthru
      _
    %v96 = vld [vmem:[#allocation4] sm:$0xff]
    %v97 = vld [vmem:[#allocation2] sm:$0xff]
    %v98 = vld [vmem:[#allocation7] sm:$0xf]
    %v99 = vld [vmem:[#allocation7 + $0x4] sm:$0xf]
    %v100 = vld [vmem:[#allocation7 + $0x8] sm:$0xf]
    %v101 = vld [vmem:[#allocation7 + $0xc] sm:$0xf]
    %v102 = vld [vmem:[#allocation7 + $0x10] sm:$0xf]
    %v103 = vld [vmem:[#allocation7 + $0x14] sm:$0xf]
    %v104 = vld [vmem:[#allocation7 + $0x18] sm:$0xf]
    %v105 = vld [vmem:[#allocation7 + $0x1c] sm:$0xf]
    %v106 = vld [vmem:[#allocation7 + $0x20] sm:$0xf]
    %v107 = vld [vmem:[#allocation7 + $0x24] sm:$0xf]
    %v108 = vld [vmem:[#allocation7 + $0x28] sm:$0xf]
    %v109 = vld [vmem:[#allocation7 + $0x2c] sm:$0xf]
    %v110 = vld [vmem:[#allocation7 + $0x30] sm:$0xf]
    %v111 = vld [vmem:[#allocation7 + $0x34] sm:$0xf]
    %v112 = vld [vmem:[#allocation7 + $0x38] sm:$0xf]
    %v113 = vld [vmem:[#allocation7 + $0x3c] sm:$0xf]
    %v114 = vld [vmem:[#allocation7 + $0x40] sm:$0xf]
    %v115 = vld [vmem:[#allocation7 + $0x44] sm:$0xf]
    %v116 = vld [vmem:[#allocation7 + $0x48] sm:$0xf]
    %v117 = vld [vmem:[#allocation7 + $0x4c] sm:$0xf]
    %v118 = vld [vmem:[#allocation7 + $0x50] sm:$0xf]
    %v119 = vld [vmem:[#allocation7 + $0x54] sm:$0xf]
    %v120 = vld [vmem:[#allocation7 + $0x58] sm:$0xf]
    %v121 = vld [vmem:[#allocation7 + $0x5c] sm:$0xf]
    %v122 = vld [vmem:[#allocation7 + $0x60] sm:$0xf]
    %v123 = vld [vmem:[#allocation7 + $0x64] sm:$0xf]
    %v124 = vld [vmem:[#allocation7 + $0x68] sm:$0xf]
    %v125 = vld [vmem:[#allocation7 + $0x6c] sm:$0xf]
    %v126 = vld [vmem:[#allocation7 + $0x70] sm:$0xf]
    %v127 = vld [vmem:[#allocation7 + $0x74] sm:$0xf]
    %v128 = vld [vmem:[#allocation7 + $0x78] sm:$0xf]
    %v129 = vld [vmem:[#allocation7 + $0x7c] sm:$0xf]
    %v131 = vunpack.c.l.b16 %v96
    %v132 = vunpack.c.h.b16 %v96
    %v133 = vpack.c.b16 %v131, %v131
    %v134 = vpack.c.b16 %v132, %v132
    %v169 = vunpack.c.l.b16 %v98
    %v170 = vunpack.c.l.b16 %v99
    %v171 = vunpack.c.l.b16 %v100
    %v172 = vunpack.c.l.b16 %v101
    %v173 = vunpack.c.l.b16 %v102
    %v174 = vunpack.c.l.b16 %v103
    %v175 = vunpack.c.l.b16 %v104
    %v176 = vunpack.c.l.b16 %v105
    %v177 = vunpack.c.l.b16 %v106
    %v178 = vunpack.c.l.b16 %v107
    %v179 = vunpack.c.l.b16 %v108
    %v180 = vunpack.c.l.b16 %v109
    %v181 = vunpack.c.l.b16 %v110
    %v182 = vunpack.c.l.b16 %v111
    %v183 = vunpack.c.l.b16 %v112
    %v184 = vunpack.c.l.b16 %v113
    %v185 = vunpack.c.l.b16 %v114
    %v186 = vunpack.c.l.b16 %v115
    %v187 = vunpack.c.l.b16 %v116
    %v188 = vunpack.c.l.b16 %v117
    %v189 = vunpack.c.l.b16 %v118
    %v190 = vunpack.c.l.b16 %v119
    %v191 = vunpack.c.l.b16 %v120
    %v192 = vunpack.c.l.b16 %v121
    %v193 = vunpack.c.l.b16 %v122
    %v194 = vunpack.c.l.b16 %v123
    %v195 = vunpack.c.l.b16 %v124
    %v196 = vunpack.c.l.b16 %v125
    %v197 = vunpack.c.l.b16 %v126
    %v198 = vunpack.c.l.b16 %v127
    %v199 = vunpack.c.l.b16 %v128
    %v200 = vunpack.c.l.b16 %v129
    %v201 = vpack.c.b16 %v170, %v169
    %v202 = vpack.c.b16 %v172, %v171
    %v203 = vpack.c.b16 %v174, %v173
    %v204 = vpack.c.b16 %v176, %v175
    %v205 = vpack.c.b16 %v178, %v177
    %v206 = vpack.c.b16 %v180, %v179
    %v207 = vpack.c.b16 %v182, %v181
    %v208 = vpack.c.b16 %v184, %v183
    %v209 = vpack.c.b16 %v186, %v185
    %v210 = vpack.c.b16 %v188, %v187
    %v211 = vpack.c.b16 %v190, %v189
    %v212 = vpack.c.b16 %v192, %v191
    %v213 = vpack.c.b16 %v194, %v193
    %v214 = vpack.c.b16 %v196, %v195
    %v215 = vpack.c.b16 %v198, %v197
    %v216 = vpack.c.b16 %v200, %v199
    %233 = vmatprep.subr.bf16.mxu0 0
    %234 = vmatpush1.bf16.msra.mxu0 %v208
    %235 = vmatprep.subr.bf16.mxu0 0
    %236 = vmatpush1.bf16.msra.mxu0 %v207
    %237 = vmatprep.subr.bf16.mxu0 0
    %238 = vmatpush1.bf16.msra.mxu0 %v206
    %239 = vmatprep.subr.bf16.mxu0 0
    %240 = vmatpush1.bf16.msra.mxu0 %v205
    %241 = vmatprep.subr.bf16.mxu0 0
    %242 = vmatpush1.bf16.msra.mxu0 %v204
    %243 = vmatprep.subr.bf16.mxu0 0
    %244 = vmatpush1.bf16.msra.mxu0 %v203
    %245 = vmatprep.subr.bf16.mxu0 0
    %246 = vmatpush1.bf16.msra.mxu0 %v202
    %247 = vmatprep.subr.bf16.mxu0 0
    %248 = vmatpush1.bf16.msra.mxu0 %v201
    %249 = vmatprep.subr.bf16.mxu0 0
    %250 = vmatpush2.bf16.msra.mxu0 %v216
    %251 = vmatprep.subr.bf16.mxu0 0
    %252 = vmatpush2.bf16.msra.mxu0 %v215
    %253 = vmatprep.subr.bf16.mxu0 0
    %254 = vmatpush2.bf16.msra.mxu0 %v214
    %255 = vmatprep.subr.bf16.mxu0 0
    %256 = vmatpush2.bf16.msra.mxu0 %v213
    %257 = vmatprep.subr.bf16.mxu0 0
    %258 = vmatpush2.bf16.msra.mxu0 %v212
    %259 = vmatprep.subr.bf16.mxu0 0
    %260 = vmatpush2.bf16.msra.mxu0 %v211
    %261 = vmatprep.subr.bf16.mxu0 0
    %262 = vmatpush2.bf16.msra.mxu0 %v210
    %263 = vmatprep.subr.bf16.mxu0 0
    %264 = vmatpush2.bf16.msra.mxu0 %v209
    %265 = vmatprep.mubr.bf16.mxu0 %v134
    %266 = vmatmul.mubr.bf16.gmra.mxu0 %v133
    %v267 = vpop.f32.mrf.mxu0
    %v268 = vadd.f32 0.0, %v267
    %v269 = vpop.f32.mrf.mxu0
    %v270 = vpop.f32.mrf.mxu0
    %v271 = vpop.f32.mrf.mxu0
    %272 = vdwg.mxu0
    %v273 = vadd.f32 %v97, %v268
    %274 = vst [vmem:[#allocation2] sm:$0xff] %v273
    %v275 = vld [vmem:[#allocation3] sm:$0xff]
    %v276 = vunpack.c.l.bf16 %v96
    %v277 = vunpack.c.h.bf16 %v96
    %v278 = vadd.f32 %v276, %v277
    %279 = vadd.xlane.f32.xlu0 %v278
    %v280 = vpop.xlane.xlu0 %279
    %v281 = vadd.f32 %v275, %v280
    %vm282 = vcmask 7168
    %283 = vst.msk [vmem:[#allocation3] sm:$0xff] %vm282, %v281
    // Predicated region
    $region50: #{tpu_custom_call.1} parent=1 // pred_check
      %p284 = pneg %p89
    $region51: #{tpu_custom_call.1} parent=1 // pred_check_branch
      %286 = sbr.rel (%p284) target = $region53
    $region52: #{tpu_custom_call.1} parent=1 // pred_region
      %v287 = vld [vmem:[#allocation3] sm:$0xff]
      %v288 = vmax.f32 %v287, 1.0
      %v289 = vrcp.pop %v288
      %v290 = vld [vmem:[#allocation2] sm:$0xff]
      %292 = vset.pattern.permute.xlu0 0
      %293 = vperm.xlu0 %292, %v289
      %v294 = vpop.permute.xlu0 %293
      %v296 = vmul.f32 %v290, %v294
      %v297 = vpack.c.bf16 %v296, %v296
      %v298 = vld [vmem:[#allocation12] sm:$0xf]
      %v299 = vld [vmem:[#allocation12 + $0x4] sm:$0xf]
      %v300 = vld [vmem:[#allocation12 + $0x8] sm:$0xf]
      %v301 = vld [vmem:[#allocation12 + $0xc] sm:$0xf]
      %v302 = vld [vmem:[#allocation12 + $0x10] sm:$0xf]
      %v303 = vld [vmem:[#allocation12 + $0x14] sm:$0xf]
      %v304 = vld [vmem:[#allocation12 + $0x18] sm:$0xf]
      %v305 = vld [vmem:[#allocation12 + $0x1c] sm:$0xf]
      %v306 = vld [vmem:[#allocation12 + $0x20] sm:$0xf]
      %v307 = vld [vmem:[#allocation12 + $0x24] sm:$0xf]
      %v308 = vld [vmem:[#allocation12 + $0x28] sm:$0xf]
      %v309 = vld [vmem:[#allocation12 + $0x2c] sm:$0xf]
      %v310 = vld [vmem:[#allocation12 + $0x30] sm:$0xf]
      %v311 = vld [vmem:[#allocation12 + $0x34] sm:$0xf]
      %v312 = vld [vmem:[#allocation12 + $0x38] sm:$0xf]
      %v313 = vld [vmem:[#allocation12 + $0x3c] sm:$0xf]
      %v330 = vunpack.c.l.b16 %v298
      %v331 = vunpack.c.l.b16 %v299
      %v332 = vunpack.c.l.b16 %v300
      %v333 = vunpack.c.l.b16 %v301
      %v334 = vunpack.c.l.b16 %v302
      %v335 = vunpack.c.l.b16 %v303
      %v336 = vunpack.c.l.b16 %v304
      %v337 = vunpack.c.l.b16 %v305
      %v338 = vunpack.c.l.b16 %v306
      %v339 = vunpack.c.l.b16 %v307
      %v340 = vunpack.c.l.b16 %v308
      %v341 = vunpack.c.l.b16 %v309
      %v342 = vunpack.c.l.b16 %v310
      %v343 = vunpack.c.l.b16 %v311
      %v344 = vunpack.c.l.b16 %v312
      %v345 = vunpack.c.l.b16 %v313
      %v346 = vpack.c.b16 %v331, %v330
      %v347 = vpack.c.b16 %v333, %v332
      %v348 = vpack.c.b16 %v335, %v334
      %v349 = vpack.c.b16 %v337, %v336
      %v350 = vpack.c.b16 %v339, %v338
      %v351 = vpack.c.b16 %v341, %v340
      %v352 = vpack.c.b16 %v343, %v342
      %v353 = vpack.c.b16 %v345, %v344
      %362 = vmatprep.subr.bf16.mxu0 0
      %363 = vmatpush1.bf16.msra.mxu0 %v353
      %364 = vmatprep.subr.bf16.mxu0 0
      %365 = vmatpush1.bf16.msra.mxu0 %v352
      %366 = vmatprep.subr.bf16.mxu0 0
      %367 = vmatpush1.bf16.msra.mxu0 %v351
      %368 = vmatprep.subr.bf16.mxu0 0
      %369 = vmatpush1.bf16.msra.mxu0 %v350
      %370 = vmatprep.subr.bf16.mxu0 0
      %371 = vmatpush1.bf16.msra.mxu0 %v349
      %372 = vmatprep.subr.bf16.mxu0 0
      %373 = vmatpush1.bf16.msra.mxu0 %v348
      %374 = vmatprep.subr.bf16.mxu0 0
      %375 = vmatpush1.bf16.msra.mxu0 %v347
      %376 = vmatprep.subr.bf16.mxu0 0
      %377 = vmatpush1.bf16.msra.mxu0 %v346
      %378 = vmatprep.subr.bf16.mxu0 0
      %379 = vmatpush2.bf16.msra.mxu0 0
      %380 = vmatprep.subr.bf16.mxu0 0
      %381 = vmatpush2.bf16.msra.mxu0 0
      %382 = vmatprep.subr.bf16.mxu0 0
      %383 = vmatpush2.bf16.msra.mxu0 0
      %384 = vmatprep.subr.bf16.mxu0 0
      %385 = vmatpush2.bf16.msra.mxu0 0
      %386 = vmatprep.subr.bf16.mxu0 0
      %387 = vmatpush2.bf16.msra.mxu0 0
      %388 = vmatprep.subr.bf16.mxu0 0
      %389 = vmatpush2.bf16.msra.mxu0 0
      %390 = vmatprep.subr.bf16.mxu0 0
      %391 = vmatpush2.bf16.msra.mxu0 0
      %392 = vmatprep.subr.bf16.mxu0 0
      %393 = vmatpush2.bf16.msra.mxu0 0
      %394 = vmatprep.mubr.bf16.mxu0 0
      %395 = vmatmul.mubr.bf16.gmra.mxu0 %v297
      %v396 = vpop.f32.mrf.mxu0
      %v397 = vadd.f32 0.0, %v396
      %v398 = vpop.f32.mrf.mxu0
      %v399 = vpop.f32.mrf.mxu0
      %v400 = vpop.f32.mrf.mxu0
      %401 = vdwg.mxu0
      %v402 = vld [vmem:[#allocation9] sm:$0xf]
      %v403 = vld [vmem:[#allocation10] sm:$0xf]
      %v404 = vld [vmem:[#allocation10 + $0x4] sm:$0xf]
      %v405 = vld [vmem:[#allocation10 + $0x8] sm:$0xf]
      %v406 = vld [vmem:[#allocation10 + $0xc] sm:$0xf]
      %v407 = vld [vmem:[#allocation10 + $0x10] sm:$0xf]
      %v408 = vld [vmem:[#allocation10 + $0x14] sm:$0xf]
      %v409 = vld [vmem:[#allocation10 + $0x18] sm:$0xf]
      %v410 = vld [vmem:[#allocation10 + $0x1c] sm:$0xf]
      %v411 = vld [vmem:[#allocation10 + $0x20] sm:$0xf]
      %v412 = vld [vmem:[#allocation10 + $0x24] sm:$0xf]
      %v413 = vld [vmem:[#allocation10 + $0x28] sm:$0xf]
      %v414 = vld [vmem:[#allocation10 + $0x2c] sm:$0xf]
      %v415 = vld [vmem:[#allocation10 + $0x30] sm:$0xf]
      %v416 = vld [vmem:[#allocation10 + $0x34] sm:$0xf]
      %v417 = vld [vmem:[#allocation10 + $0x38] sm:$0xf]
      %v418 = vld [vmem:[#allocation10 + $0x3c] sm:$0xf]
      %v435 = vunpack.c.l.b16 %v403
      %v436 = vunpack.c.l.b16 %v404
      %v437 = vunpack.c.l.b16 %v405
      %v438 = vunpack.c.l.b16 %v406
      %v439 = vunpack.c.l.b16 %v407
      %v440 = vunpack.c.l.b16 %v408
      %v441 = vunpack.c.l.b16 %v409
      %v442 = vunpack.c.l.b16 %v410
      %v443 = vunpack.c.l.b16 %v411
      %v444 = vunpack.c.l.b16 %v412
      %v445 = vunpack.c.l.b16 %v413
      %v446 = vunpack.c.l.b16 %v414
      %v447 = vunpack.c.l.b16 %v415
      %v448 = vunpack.c.l.b16 %v416
      %v449 = vunpack.c.l.b16 %v417
      %v450 = vunpack.c.l.b16 %v418
      %v451 = vpack.c.b16 %v436, %v435
      %v452 = vpack.c.b16 %v438, %v437
      %v453 = vpack.c.b16 %v440, %v439
      %v454 = vpack.c.b16 %v442, %v441
      %v455 = vpack.c.b16 %v444, %v443
      %v456 = vpack.c.b16 %v446, %v445
      %v457 = vpack.c.b16 %v448, %v447
      %v458 = vpack.c.b16 %v450, %v449
      %467 = vmatprep.subr.bf16.mxu0 0
      %468 = vmatpush1.bf16.msra.mxu0 %v458
      %469 = vmatprep.subr.bf16.mxu0 0
      %470 = vmatpush1.bf16.msra.mxu0 %v457
      %471 = vmatprep.subr.bf16.mxu0 0
      %472 = vmatpush1.bf16.msra.mxu0 %v456
      %473 = vmatprep.subr.bf16.mxu0 0
      %474 = vmatpush1.bf16.msra.mxu0 %v455
      %475 = vmatprep.subr.bf16.mxu0 0
      %476 = vmatpush1.bf16.msra.mxu0 %v454
      %477 = vmatprep.subr.bf16.mxu0 0
      %478 = vmatpush1.bf16.msra.mxu0 %v453
      %479 = vmatprep.subr.bf16.mxu0 0
      %480 = vmatpush1.bf16.msra.mxu0 %v452
      %481 = vmatprep.subr.bf16.mxu0 0
      %482 = vmatpush1.bf16.msra.mxu0 %v451
      %483 = vmatprep.subr.bf16.mxu0 0
      %484 = vmatpush2.bf16.msra.mxu0 0
      %485 = vmatprep.subr.bf16.mxu0 0
      %486 = vmatpush2.bf16.msra.mxu0 0
      %487 = vmatprep.subr.bf16.mxu0 0
      %488 = vmatpush2.bf16.msra.mxu0 0
      %489 = vmatprep.subr.bf16.mxu0 0
      %490 = vmatpush2.bf16.msra.mxu0 0
      %491 = vmatprep.subr.bf16.mxu0 0
      %492 = vmatpush2.bf16.msra.mxu0 0
      %493 = vmatprep.subr.bf16.mxu0 0
      %494 = vmatpush2.bf16.msra.mxu0 0
      %495 = vmatprep.subr.bf16.mxu0 0
      %496 = vmatpush2.bf16.msra.mxu0 0
      %497 = vmatprep.subr.bf16.mxu0 0
      %498 = vmatpush2.bf16.msra.mxu0 0
      %499 = vmatprep.mubr.bf16.mxu0 0
      %500 = vmatmul.mubr.bf16.gmra.mxu0 %v402
      %v501 = vpop.f32.mrf.mxu0
      %v502 = vadd.f32 %v397, %v501
      %v503 = vpop.f32.mrf.mxu0
      %v504 = vpop.f32.mrf.mxu0
      %v505 = vpop.f32.mrf.mxu0
      %506 = vdwg.mxu0
      %v507 = vld [vmem:[%s5] sm:$0x1]
      %v509 = vlaneseq
      %v510 = vshrl.u32 %v509, 7
      %v511 = vsub.s32 0, %v510
      %v512 = vrot.slane %v507, %v511
      %v514 = vadd.f32 %v502, %v512
      %v515 = vmax.f32 %v514, 0.0
      %516 = vst [vmem:[#allocation13] sm:$0xff] %v515
    $region53: #{tpu_custom_call.1} parent=1 // pred_fallthru
      _
    // Predicated region
    $region54: #{tpu_custom_call.1} parent=1 // pred_check
      _
    $region55: #{tpu_custom_call.1} parent=1 // pred_check_branch
      %518 = sbr.rel (0) target = $region57
    $region56: #{tpu_custom_call.1} parent=1 // pred_region
      %s520 = ssub.s32 128, 128
      %521 = vsyncadd [#allocation6], %s520
      %s523 = sshll.u32 [#allocation13], 4
      %s524 = int_to_ptr.vmem [resolvable:$true] %s523
      %526 = dma.vmem_to_hbm [thread:$0]  %s524, 128, %s6, [#allocation6]
    $region57: #{tpu_custom_call.1} parent=1 // pred_fallthru
      _
    // Predicated region
    $region58: #{tpu_custom_call.1} parent=1 // pred_check
      _
    $region59: #{tpu_custom_call.1} parent=1 // pred_check_branch
      %528 = sbr.rel (0) target = $region61
    $region60: #{tpu_custom_call.1} parent=1 // pred_region
      %529 = dma.done [#allocation6], 128
    $region61: #{tpu_custom_call.1} parent=1 // pred_fallthru
      _
    %530 = vsyncpa [#allocation5], 1
    %531 = vsyncpa [#allocation8], 1
    %532 = vsyncpa [#allocation11], 1
    %533 = vsyncpa [#allocation6], 1

</llo_original>
